<compile_context>
chip_gen: v6e
topology: v6e:2x2x1
jax: 0.10.0
libtpu: 0.0.40
codegen_flags: <defaults>
</compile_context>

<pallas_src>
import functools

import jax
import jax.numpy as jnp
import numpy as np
from jax.experimental import pallas as pl
from jax.experimental.pallas import tpu as pltpu
from scipy.optimize import linear_sum_assignment


def _cdiv(a, b):
    return (a + b - 1) // b


def _round_up(x, m):
    return _cdiv(x, m) * m


def _pick_tiles(Q, T):
    """Pick sublane/lane-dense tiles that minimize padding waste."""
    n_q = _cdiv(max(Q, 1), 256)                 # fewest tiles with Q_tile <= 256
    Q_tile = _round_up(_cdiv(max(Q, 1), n_q), 8)
    Q_pad = Q_tile * n_q
    t_gran = _cdiv(max(T, 1), 128)              # 128-lane granules needed
    n_t = _cdiv(t_gran, 4)                      # fewest tiles with T_tile <= 512
    T_tile = 128 * _cdiv(t_gran, n_t)
    T_pad = T_tile * n_t
    return Q_tile, Q_pad, T_tile, T_pad


def _cost_kernel(num_classes, w_class, w_bbox, w_giou,
                 probs_ref, pboxes_ref, labels_ref, tboxes_t_ref, cost_ref):
    probs = probs_ref[0]        # (Qt, C)   softmax already applied in wrapper
    pb = pboxes_ref[0]          # (Qt, 6)
    labels = labels_ref[0]      # (1, Tt)   int32
    tbt = tboxes_t_ref[0]       # (6, Tt)
    Tt = tbt.shape[1]

    # ---- class cost: in-kernel (weighted, negated) one-hot + MXU matmul ----
    # Weight is folded into the one-hot values -> no extra (Q, T) multiply.
    iota_c = jax.lax.broadcasted_iota(jnp.int32, (num_classes, Tt), 0)
    onehot_w = jnp.where(iota_c == labels,
                         jnp.float32(-w_class), jnp.float32(0.0))        # (C, Tt)
    cost = jnp.dot(probs, onehot_w, preferred_element_type=jnp.float32)  # (Qt, Tt)

    # ---- hoist every per-coordinate extract exactly once ----
    pc = [pb[:, d:d + 1] for d in range(6)]        # (Qt, 1): centers 0..2, sizes 3..5
    tc = [tbt[d:d + 1, :] for d in range(6)]       # (1, Tt)
    p_lo = [pc[a] - 0.5 * pc[a + 3] for a in range(3)]
    p_hi = [pc[a] + 0.5 * pc[a + 3] for a in range(3)]
    t_lo = [tc[a] - 0.5 * tc[a + 3] for a in range(3)]
    t_hi = [tc[a] + 0.5 * tc[a + 3] for a in range(3)]

    # ---- cost_bbox = L1 cdist, accumulated straight into the cost tile ----
    l1 = jnp.abs(pc[0] - tc[0])
    for d in range(1, 6):
        l1 = l1 + jnp.abs(pc[d] - tc[d])
    cost = cost + w_bbox * l1                      # retire l1 early (fewer live tiles)

    # ---- cost_giou = -generalized_box_iou (3-D), initialized from axis 0 ----
    inter = jnp.maximum(
        jnp.minimum(p_hi[0], t_hi[0]) - jnp.maximum(p_lo[0], t_lo[0]), 0.0)
    encl = jnp.maximum(
        jnp.maximum(p_hi[0], t_hi[0]) - jnp.minimum(p_lo[0], t_lo[0]), 0.0)
    for a in range(1, 3):
        inter = inter * jnp.maximum(
            jnp.minimum(p_hi[a], t_hi[a]) - jnp.maximum(p_lo[a], t_lo[a]), 0.0)
        encl = encl * jnp.maximum(
            jnp.maximum(p_hi[a], t_hi[a]) - jnp.minimum(p_lo[a], t_lo[a]), 0.0)
    vol_p = pc[3] * pc[4] * pc[5]                  # (Qt, 1)
    vol_t = tc[3] * tc[4] * tc[5]                  # (1, Tt)

    union = vol_p + vol_t - inter
    # approx=True -> single EUP push (VALU is the binding unit here); the 1e-7
    # clamps keep padded zero-size boxes from ever producing NaN/Inf for scipy.
    r_union = pl.reciprocal(jnp.maximum(union, 1e-7), approx=True)
    r_encl = pl.reciprocal(jnp.maximum(encl, 1e-7), approx=True)
    giou = inter * r_union - (encl - union) * r_encl

    cost_ref[0] = cost - w_giou * giou


def compute_cost_matrices(pred_logits, pred_boxes, tgt_labels, tgt_boxes,
                          *, cost_class, cost_bbox, cost_giou):
    """Returns the PADDED (B, Q_pad, T_pad) assignment-cost tensor.

    Padding is sliced off on host (numpy) by the caller — a device-side slice
    would launch an extra HBM->HBM copy of the whole cost tensor.
    """
    B, Q, C = pred_logits.shape
    T = tgt_labels.shape[1]
    f32 = jnp.float32

    Q_tile, Q_pad, T_tile, T_pad = _pick_tiles(Q, T)

    # Softmax once in the wrapper (B*Q*C is tiny) -> no per-T-tile recompute.
    probs = jax.nn.softmax(pred_logits.astype(f32), axis=-1)
    probs_p = jnp.pad(probs, ((0, 0), (0, Q_pad - Q), (0, 0)))
    pboxes_p = jnp.pad(pred_boxes.astype(f32), ((0, 0), (0, Q_pad - Q), (0, 0)))
    # Padded target columns get label == C -> all-zero one-hot -> zero class cost.
    labels_p = jnp.pad(tgt_labels.astype(jnp.int32), ((0, 0), (0, T_pad - T)),
                       constant_values=C)[:, None, :]                   # (B, 1, T_pad)
    tboxes_p = jnp.pad(tgt_boxes.astype(f32), ((0, 0), (0, T_pad - T), (0, 0)))
    tboxes_t = jnp.transpose(tboxes_p, (0, 2, 1))                       # (B, 6, T_pad)

    kernel = functools.partial(
        _cost_kernel, C, float(cost_class), float(cost_bbox), float(cost_giou))

    # Advisory cost estimate so XLA schedules the surrounding pad/transpose/D2H
    # around a correctly sized custom call.
    elems = B * Q_pad * T_pad
    cost_estimate = pl.CostEstimate(
        flops=int(55 * elems + 2 * B * Q_pad * C * T_pad),
        transcendentals=int(2 * elems),
        bytes_accessed=int(4 * elems + 4 * B * Q_pad * (C + 6) + 4 * B * 7 * T_pad),
    )

    cost_padded = pl.pallas_call(
        kernel,
        out_shape=jax.ShapeDtypeStruct((B, Q_pad, T_pad), f32),
        grid_spec=pltpu.PrefetchScalarGridSpec(
            num_scalar_prefetch=0,
            grid=(B, Q_pad // Q_tile, T_pad // T_tile),
            in_specs=[
                pl.BlockSpec((1, Q_tile, C), lambda b, qi, ti: (b, qi, 0)),
                pl.BlockSpec((1, Q_tile, 6), lambda b, qi, ti: (b, qi, 0)),
                pl.BlockSpec((1, 1, T_tile), lambda b, qi, ti: (b, 0, ti)),
                pl.BlockSpec((1, 6, T_tile), lambda b, qi, ti: (b, 0, ti)),
            ],
            out_specs=pl.BlockSpec((1, Q_tile, T_tile),
                                   lambda b, qi, ti: (b, qi, ti)),
        ),
        compiler_params=pltpu.CompilerParams(
            dimension_semantics=("parallel", "parallel", "parallel"),
            vmem_limit_bytes=32 * 1024 * 1024),
        cost_estimate=cost_estimate,
    )(probs_p, pboxes_p, labels_p, tboxes_t)

    return cost_padded


class HungarianMatcher:
    """JAX/Pallas port of the PyTorch HungarianMatcher forward pass."""

    def __init__(self, cost_class, cost_bbox, cost_giou):
        assert cost_class != 0 or cost_bbox != 0 or cost_giou != 0, \
            "all costs cant be 0"
        self.cost_class = cost_class
        self.cost_bbox = cost_bbox
        self.cost_giou = cost_giou

    def __call__(self, outputs, targets):
        pred_logits = outputs["pred_logits"]
        pred_boxes = outputs["pred_boxes"]
        # NOTE: real DETR batches have ragged T; stack() requires equal T here
        # (the kernel already handles padded columns via label == C).
        tgt_labels = jnp.stack([t["labels"] for t in targets])
        tgt_boxes = jnp.stack([t["boxes"] for t in targets])
        B, Q, _ = pred_logits.shape
        T = tgt_labels.shape[1]

        cost_padded = compute_cost_matrices(
            pred_logits, pred_boxes, tgt_labels, tgt_boxes,
            cost_class=self.cost_class, cost_bbox=self.cost_bbox,
            cost_giou=self.cost_giou)

        # Host-side un-pad slice (free) instead of a device-side copy.
        # TODO(synk): overlap per-batch D2H transfers with the scipy solves to
        # hide most of the remaining non-kernel wall-clock.
        cost_host = np.asarray(jax.block_until_ready(cost_padded))[:, :Q, :T]

        # TODO(synk): linear_sum_assignment (Hungarian algorithm) is a
        # sequential combinatorial solve with no clean Pallas equivalent; host.
        indices = []
        for b in range(B):
            src_idx, tgt_idx = linear_sum_assignment(cost_host[b])
            indices.append((jnp.asarray(src_idx), jnp.asarray(tgt_idx)))
        return indices


def _reference_cost(pred_logits, pred_boxes, tgt_labels, tgt_boxes,
                    cost_class, cost_bbox, cost_giou):
    """Pure-JAX reference for correctness checking."""
    probs = jax.nn.softmax(pred_logits, axis=-1)            # (B, Q, C)
    B = probs.shape[0]
    costs = []
    for b in range(B):
        p, pb = probs[b], pred_boxes[b]
        ids, tb = tgt_labels[b], tgt_boxes[b]
        c_class = -p[:, ids]
        c_bbox = jnp.sum(jnp.abs(pb[:, None, :] - tb[None, :, :]), axis=-1)
        p_lo, p_hi = pb[:, :3] - 0.5 * pb[:, 3:], pb[:, :3] + 0.5 * pb[:, 3:]
        t_lo, t_hi = tb[:, :3] - 0.5 * tb[:, 3:], tb[:, :3] + 0.5 * tb[:, 3:]
        lt = jnp.maximum(p_lo[:, None, :], t_lo[None, :, :])
        rb = jnp.minimum(p_hi[:, None, :], t_hi[None, :, :])
        inter = jnp.prod(jnp.clip(rb - lt, 0.0, None), axis=-1)
        vol_p = jnp.prod(p_hi - p_lo, axis=-1)
        vol_t = jnp.prod(t_hi - t_lo, axis=-1)
        union = vol_p[:, None] + vol_t[None, :] - inter
        iou = inter / union
        lt_e = jnp.minimum(p_lo[:, None, :], t_lo[None, :, :])
        rb_e = jnp.maximum(p_hi[:, None, :], t_hi[None, :, :])
        encl = jnp.prod(jnp.clip(rb_e - lt_e, 0.0, None), axis=-1)
        giou = iou - (encl - union) / encl
        costs.append(cost_bbox * c_bbox + cost_class * c_class
                     + cost_giou * (-giou))
    return jnp.stack(costs)


if __name__ == "__main__":
    B, Q, C, T = 2, 8, 16, 4   # batch, queries, classes, targets per batch

    key = jax.random.PRNGKey(0)
    k1, k2, k3, k4, k5, k6 = jax.random.split(key, 6)

    pred_logits = jax.random.normal(k1, (B, Q, C), dtype=jnp.float32)
    pred_centers = jax.random.uniform(k2, (B, Q, 3), minval=0.2, maxval=0.8)
    pred_sizes = jax.random.uniform(k3, (B, Q, 3), minval=0.1, maxval=0.4)
    pred_boxes = jnp.concatenate([pred_centers, pred_sizes], axis=-1)

    tgt_labels = jax.random.randint(k4, (B, T), 0, C, dtype=jnp.int32)
    tgt_centers = jax.random.uniform(k5, (B, T, 3), minval=0.2, maxval=0.8)
    tgt_sizes = jax.random.uniform(k6, (B, T, 3), minval=0.1, maxval=0.4)
    tgt_boxes = jnp.concatenate([tgt_centers, tgt_sizes], axis=-1)

    outputs = {"pred_logits": pred_logits, "pred_boxes": pred_boxes}
    targets = [{"labels": tgt_labels[b], "boxes": tgt_boxes[b]}
               for b in range(B)]

    # --- correctness check of the Pallas cost matrix against a pure-JAX ref ---
    cost_padded = compute_cost_matrices(
        pred_logits, pred_boxes, tgt_labels, tgt_boxes,
        cost_class=1.0, cost_bbox=5.0, cost_giou=2.0)
    cost_host = np.asarray(jax.block_until_ready(cost_padded))[:, :Q, :T]

    ref = _reference_cost(pred_logits, pred_boxes, tgt_labels, tgt_boxes,
                          1.0, 5.0, 2.0)
    # tolerance 2e-3: the two GIoU reciprocals use the EUP approx reciprocal
    # (~2^-12 relative error), per the performance review.
    np.testing.assert_allclose(cost_host, np.asarray(ref),
                               rtol=2e-3, atol=2e-3)

    # --- full forward pass (matches the PyTorch module: returns indices) ---
    matcher = HungarianMatcher(cost_class=1.0, cost_bbox=5.0, cost_giou=2.0)
    indices = matcher(outputs, targets)
    for src_idx, tgt_idx in indices:
        assert src_idx.shape == (T,) and tgt_idx.shape == (T,)

    print("KERNEL_OK")
</pallas_src>

<mosaic_0001>
module attributes {stable_mosaic.version = 11 : i64} {
  func.func @_cost_kernel(%arg0: i32, %arg1: i32, %arg2: i32, %arg3: memref<1x8x16xf32, #tpu.memory_space<vmem>>, %arg4: memref<1x8x6xf32, #tpu.memory_space<vmem>>, %arg5: memref<1x1x128xi32, #tpu.memory_space<vmem>>, %arg6: memref<1x6x128xf32, #tpu.memory_space<vmem>>, %arg7: memref<1x8x128xf32, #tpu.memory_space<vmem>>) attributes {dimension_semantics = [#tpu.dimension_semantics<parallel>, #tpu.dimension_semantics<parallel>, #tpu.dimension_semantics<parallel>], iteration_bounds = array<i64: 2, 1, 1>, scalar_prefetch = 0 : i64, scratch_operands = 0 : i64, tpu.core_type = #tpu.core_type<tc>, window_params = [{transform_indices = @transform_0, window_bounds = array<i64: 1, 8, 16>}, {transform_indices = @transform_1, window_bounds = array<i64: 1, 8, 6>}, {transform_indices = @transform_2, window_bounds = array<i64: 1, 1, 128>}, {transform_indices = @transform_3, window_bounds = array<i64: 1, 6, 128>}, {transform_indices = @transform_4, window_bounds = array<i64: 1, 8, 128>}]} {
    %c0 = arith.constant 0 : index
    %c0_0 = arith.constant 0 : index
    %c0_1 = arith.constant 0 : index
    %0 = vector.load %arg3[%c0, %c0_0, %c0_1] : memref<1x8x16xf32, #tpu.memory_space<vmem>>, vector<1x8x16xf32>
    %1 = vector.shape_cast %0 : vector<1x8x16xf32> to vector<8x16xf32>
    %c0_2 = arith.constant 0 : index
    %c0_3 = arith.constant 0 : index
    %c0_4 = arith.constant 0 : index
    %2 = vector.load %arg4[%c0_2, %c0_3, %c0_4] : memref<1x8x6xf32, #tpu.memory_space<vmem>>, vector<1x8x6xf32>
    %3 = vector.shape_cast %2 : vector<1x8x6xf32> to vector<8x6xf32>
    %c0_5 = arith.constant 0 : index
    %c0_6 = arith.constant 0 : index
    %c0_7 = arith.constant 0 : index
    %4 = vector.load %arg5[%c0_5, %c0_6, %c0_7] : memref<1x1x128xi32, #tpu.memory_space<vmem>>, vector<1x1x128xi32>
    %5 = vector.shape_cast %4 : vector<1x1x128xi32> to vector<1x128xi32>
    %c0_8 = arith.constant 0 : index
    %c0_9 = arith.constant 0 : index
    %c0_10 = arith.constant 0 : index
    %6 = vector.load %arg6[%c0_8, %c0_9, %c0_10] : memref<1x6x128xf32, #tpu.memory_space<vmem>>, vector<1x6x128xf32>
    %7 = vector.shape_cast %6 : vector<1x6x128xf32> to vector<6x128xf32>
    %8 = tpu.iota {dimensions = array<i32: 0>} : vector<16x128xi32>
    %9 = vector.broadcast %5 : vector<1x128xi32> to vector<16x128xi32>
    %10 = arith.cmpi eq, %8, %9 : vector<16x128xi32>
    %cst = arith.constant -1.000000e+00 : f32
    %cst_11 = arith.constant 0.000000e+00 : f32
    %11 = vector.broadcast %cst : f32 to vector<16x128xf32>
    %12 = vector.broadcast %cst_11 : f32 to vector<16x128xf32>
    %13 = arith.select %10, %11, %12 : vector<16x128xi1>, vector<16x128xf32>
    %cst_12 = arith.constant dense<0.000000e+00> : vector<8x128xf32>
    %14 = tpu.matmul %1, %13, %cst_12 {dimension_numbers = #tpu.dot_dimension_numbers<[1], [0], [0], [1], [0, 0, 1, 1], [], []>} : vector<8x16xf32>, vector<16x128xf32>, vector<8x128xf32> -> vector<8x128xf32>
    %15 = vector.extract_strided_slice %3 {offsets = [0, 0], sizes = [8, 1], strides = [1, 1]} : vector<8x6xf32> to vector<8x1xf32>
    %16 = vector.extract_strided_slice %3 {offsets = [0, 1], sizes = [8, 1], strides = [1, 1]} : vector<8x6xf32> to vector<8x1xf32>
    %17 = vector.extract_strided_slice %3 {offsets = [0, 2], sizes = [8, 1], strides = [1, 1]} : vector<8x6xf32> to vector<8x1xf32>
    %18 = vector.extract_strided_slice %3 {offsets = [0, 3], sizes = [8, 1], strides = [1, 1]} : vector<8x6xf32> to vector<8x1xf32>
    %19 = vector.extract_strided_slice %3 {offsets = [0, 4], sizes = [8, 1], strides = [1, 1]} : vector<8x6xf32> to vector<8x1xf32>
    %20 = vector.extract_strided_slice %3 {offsets = [0, 5], sizes = [8, 1], strides = [1, 1]} : vector<8x6xf32> to vector<8x1xf32>
    %21 = vector.extract_strided_slice %7 {offsets = [0, 0], sizes = [1, 128], strides = [1, 1]} : vector<6x128xf32> to vector<1x128xf32>
    %22 = vector.extract_strided_slice %7 {offsets = [1, 0], sizes = [1, 128], strides = [1, 1]} : vector<6x128xf32> to vector<1x128xf32>
    %23 = vector.extract_strided_slice %7 {offsets = [2, 0], sizes = [1, 128], strides = [1, 1]} : vector<6x128xf32> to vector<1x128xf32>
    %24 = vector.extract_strided_slice %7 {offsets = [3, 0], sizes = [1, 128], strides = [1, 1]} : vector<6x128xf32> to vector<1x128xf32>
    %25 = vector.extract_strided_slice %7 {offsets = [4, 0], sizes = [1, 128], strides = [1, 1]} : vector<6x128xf32> to vector<1x128xf32>
    %26 = vector.extract_strided_slice %7 {offsets = [5, 0], sizes = [1, 128], strides = [1, 1]} : vector<6x128xf32> to vector<1x128xf32>
    %cst_13 = arith.constant 5.000000e-01 : f32
    %27 = vector.broadcast %cst_13 : f32 to vector<8x1xf32>
    %28 = arith.mulf %27, %18 : vector<8x1xf32>
    %29 = arith.subf %15, %28 : vector<8x1xf32>
    %cst_14 = arith.constant 5.000000e-01 : f32
    %30 = vector.broadcast %cst_14 : f32 to vector<8x1xf32>
    %31 = arith.mulf %30, %19 : vector<8x1xf32>
    %32 = arith.subf %16, %31 : vector<8x1xf32>
    %cst_15 = arith.constant 5.000000e-01 : f32
    %33 = vector.broadcast %cst_15 : f32 to vector<8x1xf32>
    %34 = arith.mulf %33, %20 : vector<8x1xf32>
    %35 = arith.subf %17, %34 : vector<8x1xf32>
    %cst_16 = arith.constant 5.000000e-01 : f32
    %36 = vector.broadcast %cst_16 : f32 to vector<8x1xf32>
    %37 = arith.mulf %36, %18 : vector<8x1xf32>
    %38 = arith.addf %15, %37 : vector<8x1xf32>
    %cst_17 = arith.constant 5.000000e-01 : f32
    %39 = vector.broadcast %cst_17 : f32 to vector<8x1xf32>
    %40 = arith.mulf %39, %19 : vector<8x1xf32>
    %41 = arith.addf %16, %40 : vector<8x1xf32>
    %cst_18 = arith.constant 5.000000e-01 : f32
    %42 = vector.broadcast %cst_18 : f32 to vector<8x1xf32>
    %43 = arith.mulf %42, %20 : vector<8x1xf32>
    %44 = arith.addf %17, %43 : vector<8x1xf32>
    %cst_19 = arith.constant 5.000000e-01 : f32
    %45 = vector.broadcast %cst_19 : f32 to vector<1x128xf32>
    %46 = arith.mulf %45, %24 : vector<1x128xf32>
    %47 = arith.subf %21, %46 : vector<1x128xf32>
    %cst_20 = arith.constant 5.000000e-01 : f32
    %48 = vector.broadcast %cst_20 : f32 to vector<1x128xf32>
    %49 = arith.mulf %48, %25 : vector<1x128xf32>
    %50 = arith.subf %22, %49 : vector<1x128xf32>
    %cst_21 = arith.constant 5.000000e-01 : f32
    %51 = vector.broadcast %cst_21 : f32 to vector<1x128xf32>
    %52 = arith.mulf %51, %26 : vector<1x128xf32>
    %53 = arith.subf %23, %52 : vector<1x128xf32>
    %cst_22 = arith.constant 5.000000e-01 : f32
    %54 = vector.broadcast %cst_22 : f32 to vector<1x128xf32>
    %55 = arith.mulf %54, %24 : vector<1x128xf32>
    %56 = arith.addf %21, %55 : vector<1x128xf32>
    %cst_23 = arith.constant 5.000000e-01 : f32
    %57 = vector.broadcast %cst_23 : f32 to vector<1x128xf32>
    %58 = arith.mulf %57, %25 : vector<1x128xf32>
    %59 = arith.addf %22, %58 : vector<1x128xf32>
    %cst_24 = arith.constant 5.000000e-01 : f32
    %60 = vector.broadcast %cst_24 : f32 to vector<1x128xf32>
    %61 = arith.mulf %60, %26 : vector<1x128xf32>
    %62 = arith.addf %23, %61 : vector<1x128xf32>
    %63 = vector.broadcast %15 : vector<8x1xf32> to vector<8x128xf32>
    %64 = vector.broadcast %21 : vector<1x128xf32> to vector<8x128xf32>
    %65 = arith.subf %63, %64 : vector<8x128xf32>
    %66 = math.absf %65 : vector<8x128xf32>
    %67 = vector.broadcast %16 : vector<8x1xf32> to vector<8x128xf32>
    %68 = vector.broadcast %22 : vector<1x128xf32> to vector<8x128xf32>
    %69 = arith.subf %67, %68 : vector<8x128xf32>
    %70 = math.absf %69 : vector<8x128xf32>
    %71 = arith.addf %66, %70 : vector<8x128xf32>
    %72 = vector.broadcast %17 : vector<8x1xf32> to vector<8x128xf32>
    %73 = vector.broadcast %23 : vector<1x128xf32> to vector<8x128xf32>
    %74 = arith.subf %72, %73 : vector<8x128xf32>
    %75 = math.absf %74 : vector<8x128xf32>
    %76 = arith.addf %71, %75 : vector<8x128xf32>
    %77 = vector.broadcast %18 : vector<8x1xf32> to vector<8x128xf32>
    %78 = vector.broadcast %24 : vector<1x128xf32> to vector<8x128xf32>
    %79 = arith.subf %77, %78 : vector<8x128xf32>
    %80 = math.absf %79 : vector<8x128xf32>
    %81 = arith.addf %76, %80 : vector<8x128xf32>
    %82 = vector.broadcast %19 : vector<8x1xf32> to vector<8x128xf32>
    %83 = vector.broadcast %25 : vector<1x128xf32> to vector<8x128xf32>
    %84 = arith.subf %82, %83 : vector<8x128xf32>
    %85 = math.absf %84 : vector<8x128xf32>
    %86 = arith.addf %81, %85 : vector<8x128xf32>
    %87 = vector.broadcast %20 : vector<8x1xf32> to vector<8x128xf32>
    %88 = vector.broadcast %26 : vector<1x128xf32> to vector<8x128xf32>
    %89 = arith.subf %87, %88 : vector<8x128xf32>
    %90 = math.absf %89 : vector<8x128xf32>
    %91 = arith.addf %86, %90 : vector<8x128xf32>
    %cst_25 = arith.constant 5.000000e+00 : f32
    %92 = vector.broadcast %cst_25 : f32 to vector<8x128xf32>
    %93 = arith.mulf %92, %91 : vector<8x128xf32>
    %94 = arith.addf %14, %93 : vector<8x128xf32>
    %95 = vector.broadcast %38 : vector<8x1xf32> to vector<8x128xf32>
    %96 = vector.broadcast %56 : vector<1x128xf32> to vector<8x128xf32>
    %97 = arith.minimumf %95, %96 : vector<8x128xf32>
    %98 = vector.broadcast %29 : vector<8x1xf32> to vector<8x128xf32>
    %99 = vector.broadcast %47 : vector<1x128xf32> to vector<8x128xf32>
    %100 = arith.maximumf %98, %99 : vector<8x128xf32>
    %101 = arith.subf %97, %100 : vector<8x128xf32>
    %cst_26 = arith.constant 0.000000e+00 : f32
    %102 = vector.broadcast %cst_26 : f32 to vector<8x128xf32>
    %103 = arith.maximumf %101, %102 : vector<8x128xf32>
    %104 = vector.broadcast %38 : vector<8x1xf32> to vector<8x128xf32>
    %105 = vector.broadcast %56 : vector<1x128xf32> to vector<8x128xf32>
    %106 = arith.maximumf %104, %105 : vector<8x128xf32>
    %107 = vector.broadcast %29 : vector<8x1xf32> to vector<8x128xf32>
    %108 = vector.broadcast %47 : vector<1x128xf32> to vector<8x128xf32>
    %109 = arith.minimumf %107, %108 : vector<8x128xf32>
    %110 = arith.subf %106, %109 : vector<8x128xf32>
    %cst_27 = arith.constant 0.000000e+00 : f32
    %111 = vector.broadcast %cst_27 : f32 to vector<8x128xf32>
    %112 = arith.maximumf %110, %111 : vector<8x128xf32>
    %113 = vector.broadcast %41 : vector<8x1xf32> to vector<8x128xf32>
    %114 = vector.broadcast %59 : vector<1x128xf32> to vector<8x128xf32>
    %115 = arith.minimumf %113, %114 : vector<8x128xf32>
    %116 = vector.broadcast %32 : vector<8x1xf32> to vector<8x128xf32>
    %117 = vector.broadcast %50 : vector<1x128xf32> to vector<8x128xf32>
    %118 = arith.maximumf %116, %117 : vector<8x128xf32>
    %119 = arith.subf %115, %118 : vector<8x128xf32>
    %cst_28 = arith.constant 0.000000e+00 : f32
    %120 = vector.broadcast %cst_28 : f32 to vector<8x128xf32>
    %121 = arith.maximumf %119, %120 : vector<8x128xf32>
    %122 = arith.mulf %103, %121 : vector<8x128xf32>
    %123 = vector.broadcast %41 : vector<8x1xf32> to vector<8x128xf32>
    %124 = vector.broadcast %59 : vector<1x128xf32> to vector<8x128xf32>
    %125 = arith.maximumf %123, %124 : vector<8x128xf32>
    %126 = vector.broadcast %32 : vector<8x1xf32> to vector<8x128xf32>
    %127 = vector.broadcast %50 : vector<1x128xf32> to vector<8x128xf32>
    %128 = arith.minimumf %126, %127 : vector<8x128xf32>
    %129 = arith.subf %125, %128 : vector<8x128xf32>
    %cst_29 = arith.constant 0.000000e+00 : f32
    %130 = vector.broadcast %cst_29 : f32 to vector<8x128xf32>
    %131 = arith.maximumf %129, %130 : vector<8x128xf32>
    %132 = arith.mulf %112, %131 : vector<8x128xf32>
    %133 = vector.broadcast %44 : vector<8x1xf32> to vector<8x128xf32>
    %134 = vector.broadcast %62 : vector<1x128xf32> to vector<8x128xf32>
    %135 = arith.minimumf %133, %134 : vector<8x128xf32>
    %136 = vector.broadcast %35 : vector<8x1xf32> to vector<8x128xf32>
    %137 = vector.broadcast %53 : vector<1x128xf32> to vector<8x128xf32>
    %138 = arith.maximumf %136, %137 : vector<8x128xf32>
    %139 = arith.subf %135, %138 : vector<8x128xf32>
    %cst_30 = arith.constant 0.000000e+00 : f32
    %140 = vector.broadcast %cst_30 : f32 to vector<8x128xf32>
    %141 = arith.maximumf %139, %140 : vector<8x128xf32>
    %142 = arith.mulf %122, %141 : vector<8x128xf32>
    %143 = vector.broadcast %44 : vector<8x1xf32> to vector<8x128xf32>
    %144 = vector.broadcast %62 : vector<1x128xf32> to vector<8x128xf32>
    %145 = arith.maximumf %143, %144 : vector<8x128xf32>
    %146 = vector.broadcast %35 : vector<8x1xf32> to vector<8x128xf32>
    %147 = vector.broadcast %53 : vector<1x128xf32> to vector<8x128xf32>
    %148 = arith.minimumf %146, %147 : vector<8x128xf32>
    %149 = arith.subf %145, %148 : vector<8x128xf32>
    %cst_31 = arith.constant 0.000000e+00 : f32
    %150 = vector.broadcast %cst_31 : f32 to vector<8x128xf32>
    %151 = arith.maximumf %149, %150 : vector<8x128xf32>
    %152 = arith.mulf %132, %151 : vector<8x128xf32>
    %153 = arith.mulf %18, %19 : vector<8x1xf32>
    %154 = arith.mulf %153, %20 : vector<8x1xf32>
    %155 = arith.mulf %24, %25 : vector<1x128xf32>
    %156 = arith.mulf %155, %26 : vector<1x128xf32>
    %157 = vector.broadcast %154 : vector<8x1xf32> to vector<8x128xf32>
    %158 = vector.broadcast %156 : vector<1x128xf32> to vector<8x128xf32>
    %159 = arith.addf %157, %158 : vector<8x128xf32>
    %160 = arith.subf %159, %142 : vector<8x128xf32>
    %cst_32 = arith.constant 1.000000e-07 : f32
    %161 = vector.broadcast %cst_32 : f32 to vector<8x128xf32>
    %162 = arith.maximumf %160, %161 : vector<8x128xf32>
    %163 = tpu.reciprocal %162 {approx = true} : vector<8x128xf32> -> vector<8x128xf32>
    %cst_33 = arith.constant 1.000000e-07 : f32
    %164 = vector.broadcast %cst_33 : f32 to vector<8x128xf32>
    %165 = arith.maximumf %152, %164 : vector<8x128xf32>
    %166 = tpu.reciprocal %165 {approx = true} : vector<8x128xf32> -> vector<8x128xf32>
    %167 = arith.mulf %142, %163 : vector<8x128xf32>
    %168 = arith.subf %152, %160 : vector<8x128xf32>
    %169 = arith.mulf %168, %166 : vector<8x128xf32>
    %170 = arith.subf %167, %169 : vector<8x128xf32>
    %cst_34 = arith.constant 2.000000e+00 : f32
    %171 = vector.broadcast %cst_34 : f32 to vector<8x128xf32>
    %172 = arith.mulf %171, %170 : vector<8x128xf32>
    %173 = arith.subf %94, %172 : vector<8x128xf32>
    %c0_35 = arith.constant 0 : index
    %c0_36 = arith.constant 0 : index
    %c0_37 = arith.constant 0 : index
    %174 = vector.load %arg7[%c0_35, %c0_36, %c0_37] : memref<1x8x128xf32, #tpu.memory_space<vmem>>, vector<1x8x128xf32>
    %175 = vector.shape_cast %174 : vector<1x8x128xf32> to vector<8x128xf32>
    %176 = vector.shape_cast %173 : vector<8x128xf32> to vector<1x8x128xf32>
    tpu.vector_store %arg7[%c0_35, %c0_36, %c0_37], %176 {strides = array<i32>} : memref<1x8x128xf32, #tpu.memory_space<vmem>>, vector<1x8x128xf32>,
    return
  }
  func.func @transform_0(%arg0: i32, %arg1: i32, %arg2: i32) -> (i32, i32, i32) {
    %c0_i32 = arith.constant 0 : i32
    %c0_i32_0 = arith.constant 0 : i32
    return %arg0, %arg1, %c0_i32 : i32, i32, i32
  }
  func.func @transform_1(%arg0: i32, %arg1: i32, %arg2: i32) -> (i32, i32, i32) {
    %c0_i32 = arith.constant 0 : i32
    %c0_i32_0 = arith.constant 0 : i32
    return %arg0, %arg1, %c0_i32 : i32, i32, i32
  }
  func.func @transform_2(%arg0: i32, %arg1: i32, %arg2: i32) -> (i32, i32, i32) {
    %c0_i32 = arith.constant 0 : i32
    %c0_i32_0 = arith.constant 0 : i32
    return %arg0, %c0_i32, %arg2 : i32, i32, i32
  }
  func.func @transform_3(%arg0: i32, %arg1: i32, %arg2: i32) -> (i32, i32, i32) {
    %c0_i32 = arith.constant 0 : i32
    %c0_i32_0 = arith.constant 0 : i32
    return %arg0, %c0_i32, %arg2 : i32, i32, i32
  }
  func.func @transform_4(%arg0: i32, %arg1: i32, %arg2: i32) -> (i32, i32, i32) {
    %c0_i32 = arith.constant 0 : i32
    return %arg0, %arg1, %arg2 : i32, i32, i32
  }
}

</mosaic_0001>

<llo_original>
// kernel: tpu_custom_call.1
$region0: #{tpu_custom_call.1}
  #allocation0 [shape = 'u32[]', space=smem, size = 0x4, offset = 0x4, fixed_abs, tag = 'smem constant byte address 0x4 - core index']
  #allocation1 [shape = 'u32[144,128]{1,0:T(1,128)}', space=vmem, size = 0x12000, scoped, tag = 'internal scratch']
  %s0 = inlined_call_operand.vmem [shape: f32[2,8,16], index: 0, kind: input, shape index: {}]
  %s1 = inlined_call_operand.vmem [shape: f32[2,8,6], index: 1, kind: input, shape index: {}]
  %s2 = inlined_call_operand.vmem [shape: s32[2,1,128], index: 2, kind: input, shape index: {}]
  %s3 = inlined_call_operand.vmem [shape: f32[2,6,128], index: 3, kind: input, shape index: {}]
  %s4 = inlined_call_operand.hbm [shape: f32[2,8,128], index: 4, kind: output, shape index: {}]
  %s5 = sld [smem:[#allocation0]]
  $region49: #{tpu_custom_call.1} parent=0
    _
  %s7 = ssub.s32 1, %s5
  %s8 = scalar_select 0, %s7, %s5
  $region1: #{tpu_custom_call.1} parent=0
    #allocation2 [shape = 'u8[8192]{0}', space=vmem, size = 0x2000, scoped, tag = 'output window, operand 0']
    #allocation3 [shape = 's32[2]{0}', space=sflag, size = 0x8, scoped, tag = 'scoped memory for tpu_custom_call.1']
    %9 = vsyncpa [#allocation3], 0
    %s10 = scalar_lea.sflag [#allocation3], 1
    %11 = vsyncpa %s10, 0
    loop: start=0, step=1, limit=4
    $region2: #{tpu_custom_call.1} parent=1 // loop_pre_header
      _
    $region3: #{tpu_custom_call.1} parent=1 // loop_header
      %s13 = sphi 0, %s17
      %p14 = scmp.ge.s32.totalorder %s13, 4
      %s20 = sphi 0, %s39
      %s21 = sphi 0, %s35
      %s22 = sphi 0, %s31
      %s23 = sphi 0, %s20
      %s24 = sphi 0, %s21
      %s25 = sphi 0, %s22
      %s26 = sphi 0, %s23
      %s27 = sphi 0, %s24
      %s28 = sphi 0, %s25
      %s44 = sphi 0, %s46
      %s47 = sphi 0, %s44
      %s48 = sphi 0, %s47
      %s64 = sphi 0, %s48
      %s72 = sphi 0, %s74
      %s75 = sphi 0, %s72
      %s76 = sphi 0, %s75
      %s92 = sphi 0, %s76
      %s100 = sphi 0, %s102
      %s103 = sphi 0, %s100
      %s104 = sphi 0, %s103
      %s120 = sphi 0, %s104
      %s128 = sphi 0, %s130
      %s131 = sphi 0, %s128
      %s132 = sphi 0, %s131
      %s148 = sphi 0, %s132
      %s158 = sphi 0, %s160
      %s161 = sphi 0, %s158
      %s162 = sphi 0, %s161
      %s178 = sphi 0, %s162
    $region4: #{tpu_custom_call.1} parent=1 // loop_header_branch
      %16 = sbr.rel (%p14) target = $region8
    $region5: #{tpu_custom_call.1} parent=1 // loop_body
      %s18 = ssub.s32 %s13, 1
      %s19 = ssub.s32 %s13, 2
      %s29 = sadd.s32 1, %s22
      %p30 = scmp.ge.s32.totalorder %s29, 1
      %s31 = scalar_select %p30, 0, %s29
      %s32 = sadd.s32 1, %s21
      %s33 = scalar_select %p30, %s32, %s21
      %p34 = scmp.ge.s32.totalorder %s33, 1
      %s35 = scalar_select %p34, 0, %s33
      %s36 = sadd.s32 1, %s20
      %s37 = scalar_select %p34, %s36, %s20
      %p38 = scmp.ge.s32.totalorder %s37, 2
      %s39 = scalar_select %p38, 0, %s37
      %s40 = ssub.s32 %s20, %s39
      %s41 = ssub.s32 %s21, %s35
      %s42 = sor.u32 %s40, %s41
      %p43 = scmp.eq.s32.totalorder %s42, 0
      %s45 = sadd.s32 %s44, 1
      %s46 = scalar_select %p43, %s44, %s45
      %p49 = pneg %p43
      %p50 = scmp.eq.s32.totalorder %s13, 1
      %p51 = por %p49, %p50
      %p52 = scmp.ne.s32.totalorder %s44, %s47
      %p53 = scmp.eq.s32.totalorder %s13, 0
      %p54 = por %p52, %p53
      %p55 = scmp.ne.s32.totalorder %s44, %s47
      %p56 = scmp.eq.s32.totalorder %s18, 1
      %p57 = por %p55, %p56
      %p58 = scmp.ne.s32.totalorder %s47, %s48
      %p59 = scmp.eq.s32.totalorder %s18, 0
      %p60 = por %p58, %p59
      %p61 = scmp.ne.s32.totalorder %s47, %s48
      %p62 = scmp.eq.s32.totalorder %s19, 1
      %p63 = por %p61, %p62
      %p65 = scmp.ne.s32.totalorder %s48, %s64
      %p66 = scmp.eq.s32.totalorder %s19, 0
      %p67 = por %p65, %p66
      %s68 = ssub.s32 %s20, %s39
      %s69 = ssub.s32 %s21, %s35
      %s70 = sor.u32 %s68, %s69
      %p71 = scmp.eq.s32.totalorder %s70, 0
      %s73 = sadd.s32 %s72, 1
      %s74 = scalar_select %p71, %s72, %s73
      %p77 = pneg %p71
      %p78 = scmp.eq.s32.totalorder %s13, 1
      %p79 = por %p77, %p78
      %p80 = scmp.ne.s32.totalorder %s72, %s75
      %p81 = scmp.eq.s32.totalorder %s13, 0
      %p82 = por %p80, %p81
      %p83 = scmp.ne.s32.totalorder %s72, %s75
      %p84 = scmp.eq.s32.totalorder %s18, 1
      %p85 = por %p83, %p84
      %p86 = scmp.ne.s32.totalorder %s75, %s76
      %p87 = scmp.eq.s32.totalorder %s18, 0
      %p88 = por %p86, %p87
      %p89 = scmp.ne.s32.totalorder %s75, %s76
      %p90 = scmp.eq.s32.totalorder %s19, 1
      %p91 = por %p89, %p90
      %p93 = scmp.ne.s32.totalorder %s76, %s92
      %p94 = scmp.eq.s32.totalorder %s19, 0
      %p95 = por %p93, %p94
      %s96 = ssub.s32 %s20, %s39
      %s97 = ssub.s32 %s22, %s31
      %s98 = sor.u32 %s96, %s97
      %p99 = scmp.eq.s32.totalorder %s98, 0
      %s101 = sadd.s32 %s100, 1
      %s102 = scalar_select %p99, %s100, %s101
      %p105 = pneg %p99
      %p106 = scmp.eq.s32.totalorder %s13, 1
      %p107 = por %p105, %p106
      %p108 = scmp.ne.s32.totalorder %s100, %s103
      %p109 = scmp.eq.s32.totalorder %s13, 0
      %p110 = por %p108, %p109
      %p111 = scmp.ne.s32.totalorder %s100, %s103
      %p112 = scmp.eq.s32.totalorder %s18, 1
      %p113 = por %p111, %p112
      %p114 = scmp.ne.s32.totalorder %s103, %s104
      %p115 = scmp.eq.s32.totalorder %s18, 0
      %p116 = por %p114, %p115
      %p117 = scmp.ne.s32.totalorder %s103, %s104
      %p118 = scmp.eq.s32.totalorder %s19, 1
      %p119 = por %p117, %p118
      %p121 = scmp.ne.s32.totalorder %s104, %s120
      %p122 = scmp.eq.s32.totalorder %s19, 0
      %p123 = por %p121, %p122
      %s124 = ssub.s32 %s20, %s39
      %s125 = ssub.s32 %s22, %s31
      %s126 = sor.u32 %s124, %s125
      %p127 = scmp.eq.s32.totalorder %s126, 0
      %s129 = sadd.s32 %s128, 1
      %s130 = scalar_select %p127, %s128, %s129
      %p133 = pneg %p127
      %p134 = scmp.eq.s32.totalorder %s13, 1
      %p135 = por %p133, %p134
      %p136 = scmp.ne.s32.totalorder %s128, %s131
      %p137 = scmp.eq.s32.totalorder %s13, 0
      %p138 = por %p136, %p137
      %p139 = scmp.ne.s32.totalorder %s128, %s131
      %p140 = scmp.eq.s32.totalorder %s18, 1
      %p141 = por %p139, %p140
      %p142 = scmp.ne.s32.totalorder %s131, %s132
      %p143 = scmp.eq.s32.totalorder %s18, 0
      %p144 = por %p142, %p143
      %p145 = scmp.ne.s32.totalorder %s131, %s132
      %p146 = scmp.eq.s32.totalorder %s19, 1
      %p147 = por %p145, %p146
      %p149 = scmp.ne.s32.totalorder %s132, %s148
      %p150 = scmp.eq.s32.totalorder %s19, 0
      %p151 = por %p149, %p150
      %s152 = ssub.s32 %s20, %s39
      %s153 = ssub.s32 %s21, %s35
      %s154 = sor.u32 %s152, %s153
      %s155 = ssub.s32 %s22, %s31
      %s156 = sor.u32 %s154, %s155
      %p157 = scmp.eq.s32.totalorder %s156, 0
      %s159 = sadd.s32 %s158, 1
      %s160 = scalar_select %p157, %s158, %s159
      %p163 = pneg %p157
      %p164 = scmp.eq.s32.totalorder %s13, 1
      %p165 = por %p163, %p164
      %p166 = scmp.ne.s32.totalorder %s158, %s161
      %p167 = scmp.eq.s32.totalorder %s13, 0
      %p168 = por %p166, %p167
      %p169 = scmp.ne.s32.totalorder %s158, %s161
      %p170 = scmp.eq.s32.totalorder %s18, 1
      %p171 = por %p169, %p170
      %p172 = scmp.ne.s32.totalorder %s161, %s162
      %p173 = scmp.eq.s32.totalorder %s18, 0
      %p174 = por %p172, %p173
      %p175 = scmp.ne.s32.totalorder %s161, %s162
      %p176 = scmp.eq.s32.totalorder %s19, 1
      %p177 = por %p175, %p176
      %p179 = scmp.ne.s32.totalorder %s162, %s178
      %p180 = scmp.eq.s32.totalorder %s19, 0
      %p181 = por %p179, %p180
      %p182 = scmp.le.s32.totalorder 1, %s13
      %p183 = scmp.lt.s32.totalorder %s13, 3
      %p184 = pnand %p182, %p183
      %p185 = pneg %p184
      // Predicated region
      $region9: #{tpu_custom_call.1} parent=5 // pred_check
        _
      $region10: #{tpu_custom_call.1} parent=5 // pred_check_branch
        %187 = sbr.rel (%p184) target = $region12
      $region11: #{tpu_custom_call.1} parent=5 // pred_region
        %s188 = ssub.s32 %s13, 1
      $region12: #{tpu_custom_call.1} parent=5 // pred_fallthru
        _
      %p189 = scmp.lt.s32.totalorder %s13, 2
      // Predicated region
      $region13: #{tpu_custom_call.1} parent=5 // pred_check
        %p190 = pneg %p189
      $region14: #{tpu_custom_call.1} parent=5 // pred_check_branch
        %192 = sbr.rel (%p190) target = $region16
      $region15: #{tpu_custom_call.1} parent=5 // pred_region
        // Predicated region
        $region17: #{tpu_custom_call.1} parent=15 // pred_check
          %p193 = pneg %p54
        $region18: #{tpu_custom_call.1} parent=15 // pred_check_branch
          %195 = sbr.rel (%p193) target = $region20
        $region19: #{tpu_custom_call.1} parent=15 // pred_region
          %p196 = scmp.lt.s32.totalorder %s20, 1
          %s197 = scalar_select %p196, %s20, 1
          %p198 = scmp.lt.s32.totalorder %s21, 0
          %s199 = scalar_select %p198, %s21, 0
          %s200 = sadd.s32 %s199, %s197
          %s201 = smul.addr %s200, 8
          %s202 = scalar_lea.vmem %s0, %s201
        $region20: #{tpu_custom_call.1} parent=15 // pred_fallthru
          _
        // Predicated region
        $region21: #{tpu_custom_call.1} parent=15 // pred_check
          %p203 = pneg %p82
        $region22: #{tpu_custom_call.1} parent=15 // pred_check_branch
          %205 = sbr.rel (%p203) target = $region24
        $region23: #{tpu_custom_call.1} parent=15 // pred_region
          %p206 = scmp.lt.s32.totalorder %s20, 1
          %s207 = scalar_select %p206, %s20, 1
          %p208 = scmp.lt.s32.totalorder %s21, 0
          %s209 = scalar_select %p208, %s21, 0
          %s210 = sadd.s32 %s209, %s207
          %s211 = smul.addr %s210, 8
          %s212 = scalar_lea.vmem %s1, %s211
        $region24: #{tpu_custom_call.1} parent=15 // pred_fallthru
          _
        // Predicated region
        $region25: #{tpu_custom_call.1} parent=15 // pred_check
          %p213 = pneg %p110
        $region26: #{tpu_custom_call.1} parent=15 // pred_check_branch
          %215 = sbr.rel (%p213) target = $region28
        $region27: #{tpu_custom_call.1} parent=15 // pred_region
          %p216 = scmp.lt.s32.totalorder %s20, 1
          %s217 = scalar_select %p216, %s20, 1
          %p218 = scmp.lt.s32.totalorder %s22, 0
          %s219 = scalar_select %p218, %s22, 0
          %s220 = sadd.s32 %s219, %s217
          %s221 = scalar_lea.vmem %s2, %s220
        $region28: #{tpu_custom_call.1} parent=15 // pred_fallthru
          _
        // Predicated region
        $region29: #{tpu_custom_call.1} parent=15 // pred_check
          %p222 = pneg %p138
        $region30: #{tpu_custom_call.1} parent=15 // pred_check_branch
          %224 = sbr.rel (%p222) target = $region32
        $region31: #{tpu_custom_call.1} parent=15 // pred_region
          %p225 = scmp.lt.s32.totalorder %s20, 1
          %s226 = scalar_select %p225, %s20, 1
          %p227 = scmp.lt.s32.totalorder %s22, 0
          %s228 = scalar_select %p227, %s22, 0
          %s229 = sadd.s32 %s228, %s226
          %s230 = smul.addr %s229, 8
          %s231 = scalar_lea.vmem %s3, %s230
        $region32: #{tpu_custom_call.1} parent=15 // pred_fallthru
          _
      $region16: #{tpu_custom_call.1} parent=5 // pred_fallthru
        _
      %p232 = scmp.le.s32.totalorder 1, %s13
      %p233 = scmp.lt.s32.totalorder %s13, 3
      %p234 = pnand %p232, %p233
      %p235 = pneg %p234
      // Predicated region
      $region33: #{tpu_custom_call.1} parent=5 // pred_check
        _
      $region34: #{tpu_custom_call.1} parent=5 // pred_check_branch
        %237 = sbr.rel (%p234) target = $region36
      $region35: #{tpu_custom_call.1} parent=5 // pred_region
        %s238 = ssub.s32 %s13, 1
        %p239 = scmp.lt.s32.totalorder %s23, 1
        %s240 = scalar_select %p239, %s23, 1
        %p241 = scmp.lt.s32.totalorder %s24, 0
        %s242 = scalar_select %p241, %s24, 0
        %s243 = sadd.s32 %s242, %s240
        %s244 = smul.addr %s243, 8
        %s245 = scalar_lea.vmem %s0, %s244
        %p246 = pneg %p60
        %p247 = pneg %p57
        %p248 = scmp.lt.s32.totalorder %s23, 1
        %s249 = scalar_select %p248, %s23, 1
        %p250 = scmp.lt.s32.totalorder %s24, 0
        %s251 = scalar_select %p250, %s24, 0
        %s252 = sadd.s32 %s251, %s249
        %s253 = smul.addr %s252, 8
        %s254 = scalar_lea.vmem %s1, %s253
        %p255 = pneg %p88
        %p256 = pneg %p85
        %p257 = scmp.lt.s32.totalorder %s23, 1
        %s258 = scalar_select %p257, %s23, 1
        %p259 = scmp.lt.s32.totalorder %s25, 0
        %s260 = scalar_select %p259, %s25, 0
        %s261 = sadd.s32 %s260, %s258
        %s262 = scalar_lea.vmem %s2, %s261
        %p263 = pneg %p116
        %p264 = pneg %p113
        %p265 = scmp.lt.s32.totalorder %s23, 1
        %s266 = scalar_select %p265, %s23, 1
        %p267 = scmp.lt.s32.totalorder %s25, 0
        %s268 = scalar_select %p267, %s25, 0
        %s269 = sadd.s32 %s268, %s266
        %s270 = smul.addr %s269, 8
        %s271 = scalar_lea.vmem %s3, %s270
        %p272 = pneg %p144
        %p273 = pneg %p141
        %p274 = pneg %p174
        %p275 = pneg %p171
        %s276 = sand.u32 %s161, 1
        %s277 = scalar_lea.sflag [#allocation3], %s276
        %s278 = sand.u32 %s161, 1
        %s279 = smul.addr %s278, 8
        %s280 = scalar_lea.vmem [#allocation2], %s279
        %p281 = scmp.lt.s32.totalorder %s23, 1
        %s282 = scalar_select %p281, %s23, 1
        %p283 = scmp.lt.s32.totalorder %s24, 0
        %s284 = scalar_select %p283, %s24, 0
        %s285 = sadd.s32 %s284, %s282
        %s286 = smul.addr %s285, 8
        %s287 = scalar_lea.vmem %s0, %s286
        %p288 = scmp.lt.s32.totalorder %s23, 1
        %s289 = scalar_select %p288, %s23, 1
        %p290 = scmp.lt.s32.totalorder %s24, 0
        %s291 = scalar_select %p290, %s24, 0
        %s292 = sadd.s32 %s291, %s289
        %s293 = smul.addr %s292, 8
        %s294 = scalar_lea.vmem %s1, %s293
        %p295 = scmp.lt.s32.totalorder %s23, 1
        %s296 = scalar_select %p295, %s23, 1
        %p297 = scmp.lt.s32.totalorder %s25, 0
        %s298 = scalar_select %p297, %s25, 0
        %s299 = sadd.s32 %s298, %s296
        %s300 = scalar_lea.vmem %s2, %s299
        %p301 = scmp.lt.s32.totalorder %s23, 1
        %s302 = scalar_select %p301, %s23, 1
        %p303 = scmp.lt.s32.totalorder %s25, 0
        %s304 = scalar_select %p303, %s25, 0
        %s305 = sadd.s32 %s304, %s302
        %s306 = smul.addr %s305, 8
        %s307 = scalar_lea.vmem %s3, %s306
        %v308 = vld [vmem:[%s287] sm:$0xff]
        %v309 = vld [vmem:[%s294] sm:$0xff]
        %v310 = vld [vmem:[%s300] sm:$0x1]
        %v311 = vld [vmem:[%s307] sm:$0x3f]
        %v312 = vlaneseq
        %v313 = vshrl.u32 %v312, 7
        %v314 = vadd.s32 %v313, 8
        %v315 = vlaneseq
        %v316 = vshrl.u32 %v315, 7
        %v317 = vsub.s32 0, %v316
        %v318 = vrot.slane %v310, %v317
        %vm319 = vcmp.eq.s32.totalorder %v313, %v318
        %vm320 = vcmp.eq.s32.totalorder %v314, %v318
        %v321 = vsel %vm319, -1.0, 0.0
        %v322 = vsel %vm320, -1.0, 0.0
        %v323 = vmul.f32 %v309, 0.5
        %325 = vrot.lane.b32.xlu0 %v323, 125
        %v326 = vpop.permute.xlu0 %325
        %v328 = vsub.f32 %v309, %v326
        %v329 = vadd.f32 %v309, %v326
        %v330 = vmul.f32 %v311, 0.5
        %v332 = vrot.slane %v330, 3
        %v334 = vsub.f32 %v311, %v332
        %v335 = vadd.f32 %v311, %v332
        %337 = vset.pattern.permute.xlu0 0
        %338 = vperm.xlu0 %337, %v309
        %v339 = vpop.permute.xlu0 %338
        %v341 = vlaneseq
        %v342 = vshrl.u32 %v341, 7
        %v343 = vsub.s32 0, %v342
        %v344 = vrot.slane %v311, %v343
        %v345 = vsub.f32 %v339, %v344
        %v346 = vand.u32 2147483647, %v345
        %347 = vset.pattern.permute.xlu0 1
        %348 = vperm.xlu0 %347, %v309
        %v349 = vpop.permute.xlu0 %348
        %v351 = vlaneseq
        %v352 = vshrl.u32 %v351, 7
        %v353 = vsub.s32 1, %v352
        %v354 = vrot.slane %v311, %v353
        %v355 = vsub.f32 %v349, %v354
        %v356 = vand.u32 2147483647, %v355
        %v357 = vadd.f32 %v346, %v356
        %358 = vset.pattern.permute.xlu0 2
        %359 = vperm.xlu0 %358, %v309
        %v360 = vpop.permute.xlu0 %359
        %v362 = vlaneseq
        %v363 = vshrl.u32 %v362, 7
        %v364 = vsub.s32 2, %v363
        %v365 = vrot.slane %v311, %v364
        %v366 = vsub.f32 %v360, %v365
        %v367 = vand.u32 2147483647, %v366
        %v368 = vadd.f32 %v357, %v367
        %369 = vset.pattern.permute.xlu0 3
        %370 = vperm.xlu0 %369, %v309
        %v371 = vpop.permute.xlu0 %370
        %v373 = vlaneseq
        %v374 = vshrl.u32 %v373, 7
        %v375 = vsub.s32 3, %v374
        %v376 = vrot.slane %v311, %v375
        %v377 = vsub.f32 %v371, %v376
        %v378 = vand.u32 2147483647, %v377
        %v379 = vadd.f32 %v368, %v378
        %380 = vset.pattern.permute.xlu0 4
        %381 = vperm.xlu0 %380, %v309
        %v382 = vpop.permute.xlu0 %381
        %v384 = vlaneseq
        %v385 = vshrl.u32 %v384, 7
        %v386 = vsub.s32 4, %v385
        %v387 = vrot.slane %v311, %v386
        %v388 = vsub.f32 %v382, %v387
        %v389 = vand.u32 2147483647, %v388
        %v390 = vadd.f32 %v379, %v389
        %391 = vset.pattern.permute.xlu0 5
        %392 = vperm.xlu0 %391, %v309
        %v393 = vpop.permute.xlu0 %392
        %v395 = vlaneseq
        %v396 = vshrl.u32 %v395, 7
        %v397 = vsub.s32 5, %v396
        %v398 = vrot.slane %v311, %v397
        %v399 = vsub.f32 %v393, %v398
        %v400 = vand.u32 2147483647, %v399
        %v401 = vadd.f32 %v390, %v400
        %v402 = vmul.f32 %v401, 5.0
        %vm403 = vcmask 130048
        %v405 = vsel %vm403, %v308, 0
        %407 = vmatprep.subr.mxu0 0.0
        %408 = vmatpush1.msra.mxu0 0.0
        %409 = vmatprep.subr.mxu0 0.0
        %410 = vmatpush1.msra.mxu0 0.0
        %411 = vmatprep.subr.mxu0 0.0
        %412 = vmatpush1.msra.mxu0 0.0
        %413 = vmatprep.subr.mxu0 0.0
        %414 = vmatpush1.msra.mxu0 0.0
        %415 = vmatprep.subr.mxu0 0.0
        %416 = vmatpush1.msra.mxu0 0.0
        %417 = vmatprep.subr.mxu0 0.0
        %418 = vmatpush1.msra.mxu0 0.0
        %419 = vmatprep.subr.mxu0 0.0
        %420 = vmatpush1.msra.mxu0 0.0
        %421 = vmatprep.subr.mxu0 0.0
        %422 = vmatpush1.msra.mxu0 0.0
        %423 = vmatprep.subr.mxu0 0.0
        %424 = vmatpush1.msra.mxu0 0.0
        %425 = vmatprep.subr.mxu0 0.0
        %426 = vmatpush1.msra.mxu0 0.0
        %427 = vmatprep.subr.mxu0 0.0
        %428 = vmatpush1.msra.mxu0 0.0
        %429 = vmatprep.subr.mxu0 0.0
        %430 = vmatpush1.msra.mxu0 0.0
        %431 = vmatprep.subr.mxu0 0.0
        %432 = vmatpush1.msra.mxu0 0.0
        %433 = vmatprep.subr.mxu0 0.0
        %434 = vmatpush1.msra.mxu0 0.0
        %435 = vmatprep.subr.mxu0 0.0
        %436 = vmatpush1.msra.mxu0 %v322
        %437 = vmatprep.subr.mxu0 0.0
        %438 = vmatpush1.msra.mxu0 %v321
        %439 = vmatprep.subr.mxu0 0.0
        %440 = vmatpush2.msra.mxu0 0.0
        %441 = vmatprep.subr.mxu0 0.0
        %442 = vmatpush2.msra.mxu0 0.0
        %443 = vmatprep.subr.mxu0 0.0
        %444 = vmatpush2.msra.mxu0 0.0
        %445 = vmatprep.subr.mxu0 0.0
        %446 = vmatpush2.msra.mxu0 0.0
        %447 = vmatprep.subr.mxu0 0.0
        %448 = vmatpush2.msra.mxu0 0.0
        %449 = vmatprep.subr.mxu0 0.0
        %450 = vmatpush2.msra.mxu0 0.0
        %451 = vmatprep.subr.mxu0 0.0
        %452 = vmatpush2.msra.mxu0 0.0
        %453 = vmatprep.subr.mxu0 0.0
        %454 = vmatpush2.msra.mxu0 0.0
        %455 = vmatprep.subr.mxu0 0.0
        %456 = vmatpush2.msra.mxu0 0.0
        %457 = vmatprep.subr.mxu0 0.0
        %458 = vmatpush2.msra.mxu0 0.0
        %459 = vmatprep.subr.mxu0 0.0
        %460 = vmatpush2.msra.mxu0 0.0
        %461 = vmatprep.subr.mxu0 0.0
        %462 = vmatpush2.msra.mxu0 0.0
        %463 = vmatprep.subr.mxu0 0.0
        %464 = vmatpush2.msra.mxu0 0.0
        %465 = vmatprep.subr.mxu0 0.0
        %466 = vmatpush2.msra.mxu0 0.0
        %467 = vmatprep.subr.mxu0 0.0
        %468 = vmatpush2.msra.mxu0 0.0
        %469 = vmatprep.subr.mxu0 0.0
        %470 = vmatpush2.msra.mxu0 0.0
        %471 = vmatprep.mubr.f32.mxu0 0.0
        %472 = vmatmul.mubr.f32.gmra.mxu0 %v405
        %v473 = vpop.f32.mrf.mxu0
        %v474 = vadd.f32 %v402, %v473
        %v475 = vpop.f32.mrf.mxu0
        %476 = vdwg.mxu0
        %478 = vset.pattern.permute.xlu0 0
        %479 = vperm.xlu0 %478, %v329
        %v480 = vpop.permute.xlu0 %479
        %v482 = vlaneseq
        %v483 = vshrl.u32 %v482, 7
        %v484 = vsub.s32 0, %v483
        %v485 = vrot.slane %v335, %v484
        %v486 = vmin.f32 %v480, %v485
        %488 = vset.pattern.permute.xlu0 0
        %489 = vperm.xlu0 %488, %v328
        %v490 = vpop.permute.xlu0 %489
        %v492 = vlaneseq
        %v493 = vshrl.u32 %v492, 7
        %v494 = vsub.s32 0, %v493
        %v495 = vrot.slane %v334, %v494
        %v496 = vmax.f32 %v490, %v495
        %v497 = vsub.f32 %v486, %v496
        %v498 = vmax.f32 %v497, 0.0
        %v499 = vmax.f32 %v480, %v485
        %v500 = vmin.f32 %v490, %v495
        %v501 = vsub.f32 %v499, %v500
        %v502 = vmax.f32 %v501, 0.0
        %503 = vset.pattern.permute.xlu0 1
        %504 = vperm.xlu0 %503, %v329
        %v505 = vpop.permute.xlu0 %504
        %v507 = vlaneseq
        %v508 = vshrl.u32 %v507, 7
        %v509 = vsub.s32 1, %v508
        %v510 = vrot.slane %v335, %v509
        %v511 = vmin.f32 %v505, %v510
        %512 = vset.pattern.permute.xlu0 1
        %513 = vperm.xlu0 %512, %v328
        %v514 = vpop.permute.xlu0 %513
        %v516 = vlaneseq
        %v517 = vshrl.u32 %v516, 7
        %v518 = vsub.s32 1, %v517
        %v519 = vrot.slane %v334, %v518
        %v520 = vmax.f32 %v514, %v519
        %v521 = vsub.f32 %v511, %v520
        %v522 = vmax.f32 %v521, 0.0
        %v523 = vmul.f32 %v498, %v522
        %v524 = vmax.f32 %v505, %v510
        %v525 = vmin.f32 %v514, %v519
        %v526 = vsub.f32 %v524, %v525
        %v527 = vmax.f32 %v526, 0.0
        %v528 = vmul.f32 %v502, %v527
        %529 = vset.pattern.permute.xlu0 2
        %530 = vperm.xlu0 %529, %v329
        %v531 = vpop.permute.xlu0 %530
        %v533 = vlaneseq
        %v534 = vshrl.u32 %v533, 7
        %v535 = vsub.s32 2, %v534
        %v536 = vrot.slane %v335, %v535
        %v537 = vmin.f32 %v531, %v536
        %538 = vset.pattern.permute.xlu0 2
        %539 = vperm.xlu0 %538, %v328
        %v540 = vpop.permute.xlu0 %539
        %v542 = vlaneseq
        %v543 = vshrl.u32 %v542, 7
        %v544 = vsub.s32 2, %v543
        %v545 = vrot.slane %v334, %v544
        %v546 = vmax.f32 %v540, %v545
        %v547 = vsub.f32 %v537, %v546
        %v548 = vmax.f32 %v547, 0.0
        %v549 = vmul.f32 %v523, %v548
        %v550 = vmax.f32 %v531, %v536
        %v551 = vmin.f32 %v540, %v545
        %v552 = vsub.f32 %v550, %v551
        %v553 = vmax.f32 %v552, 0.0
        %v554 = vmul.f32 %v528, %v553
        %555 = vrot.lane.b32.xlu0 %v309, 127
        %v556 = vpop.permute.xlu0 %555
        %v558 = vmul.f32 %v309, %v556
        %559 = vrot.lane.b32.xlu0 %v309, 126
        %v560 = vpop.permute.xlu0 %559
        %v562 = vmul.f32 %v558, %v560
        %v564 = vrot.slane %v311, 1
        %v566 = vmul.f32 %v311, %v564
        %v567 = vrot.slane %v311, 2
        %v569 = vmul.f32 %v566, %v567
        %571 = vset.pattern.permute.xlu0 3
        %572 = vperm.xlu0 %571, %v562
        %v573 = vpop.permute.xlu0 %572
        %v575 = vlaneseq
        %v576 = vshrl.u32 %v575, 7
        %v577 = vsub.s32 3, %v576
        %v578 = vrot.slane %v569, %v577
        %v579 = vadd.f32 %v573, %v578
        %v580 = vsub.f32 %v579, %v549
        %v581 = vmax.f32 %v580, 1e-07
        %v582 = vrcp.pop %v581
        %v583 = vmax.f32 %v554, 1e-07
        %v584 = vrcp.pop %v583
        %v585 = vmul.f32 %v549, %v582
        %v586 = vsub.f32 %v554, %v580
        %v587 = vmul.f32 %v586, %v584
        %v588 = vsub.f32 %v585, %v587
        %v589 = vmul.f32 %v588, 2.0
        %v590 = vsub.f32 %v474, %v589
        %591 = vst [vmem:[%s280] sm:$0xff] %v590
        %s592 = sand.u32 %s161, 1
        %s593 = scalar_lea.sflag [#allocation3], %s592
        %s594 = sand.u32 %s161, 1
        %s595 = smul.addr %s594, 8
        %s596 = scalar_lea.vmem [#allocation2], %s595
        // Predicated region
        $region37: #{tpu_custom_call.1} parent=35 // pred_check
          %p597 = pneg %p171
        $region38: #{tpu_custom_call.1} parent=35 // pred_check_branch
          %599 = sbr.rel (%p597) target = $region40
        $region39: #{tpu_custom_call.1} parent=35 // pred_region
          %s601 = ssub.s32 128, 128
          %602 = vsyncadd %s593, %s601
          %s603 = sadd.s32 %s25, %s24
          %s604 = sadd.s32 %s603, %s23
          %s605 = smul.addr %s604, 128
          %s606 = scalar_lea.hbm %s4, %s605
          %s608 = sshll.u32 %s596, 4
          %s609 = int_to_ptr.vmem [resolvable:$true] %s608
          %611 = dma.vmem_to_hbm [thread:$0]  %s609, 128, %s606, %s593
        $region40: #{tpu_custom_call.1} parent=35 // pred_fallthru
          _
      $region36: #{tpu_custom_call.1} parent=5 // pred_fallthru
        _
      %p612 = scmp.le.s32.totalorder 2, %s13
      // Predicated region
      $region41: #{tpu_custom_call.1} parent=5 // pred_check
        %p613 = pneg %p612
      $region42: #{tpu_custom_call.1} parent=5 // pred_check_branch
        %615 = sbr.rel (%p613) target = $region44
      $region43: #{tpu_custom_call.1} parent=5 // pred_region
        %s616 = ssub.s32 %s13, 2
        // Predicated region
        $region45: #{tpu_custom_call.1} parent=43 // pred_check
          %p617 = pneg %p177
        $region46: #{tpu_custom_call.1} parent=43 // pred_check_branch
          %619 = sbr.rel (%p617) target = $region48
        $region47: #{tpu_custom_call.1} parent=43 // pred_region
          %s620 = sand.u32 %s162, 1
          %s621 = scalar_lea.sflag [#allocation3], %s620
          %s622 = sand.u32 %s162, 1
          %s623 = smul.addr %s622, 8
          %s624 = scalar_lea.vmem [#allocation2], %s623
          %625 = dma.done %s621, 128
        $region48: #{tpu_custom_call.1} parent=43 // pred_fallthru
          _
      $region44: #{tpu_custom_call.1} parent=5 // pred_fallthru
        _
    $region6: #{tpu_custom_call.1} parent=1 // loop_footer
      %s17 = sadd.s32 1, %s13
    $region7: #{tpu_custom_call.1} parent=1 // loop_footer_branch
      %12 = sbr.rel target = $region3
    $region8: #{tpu_custom_call.1} parent=1 // loop_exit
      _
    %626 = vsyncpa [#allocation3], 1
    %s627 = scalar_lea.sflag [#allocation3], 1
    %628 = vsyncpa %s627, 1

</llo_original>
